<compile_context>
chip_gen: v7x
topology: tpu7x:2x2x1
jax: 0.10.0
libtpu: 0.0.40
codegen_flags: <defaults>
</compile_context>

<pallas_src>
import jax
import jax.numpy as jnp
from jax.experimental import pallas as pl
from jax.experimental.pallas import tpu as pltpu


HIDDEN = 256      # matches nn.Linear(input_feature, 256)
OUT_LANES = 128   # lane-dense output slab width (>= num_actions)


# ----------------------------------------------------------------------------
# Kernel (shared by plain and dueling paths — dueling math is folded into W2/b2)
# ----------------------------------------------------------------------------
def _mlp_kernel(x_ref, w1_ref, b1_ref, w2_ref, b2_ref, o_ref):
    """o = (relu(x @ W1 + b1) @ W2 + b2), 128-lane padded output slab."""
    x = x_ref[...]
    h = jnp.dot(x, w1_ref[...], preferred_element_type=jnp.float32) + b1_ref[...]
    h = jnp.maximum(h, 0.0)
    out = (jnp.dot(h.astype(w2_ref.dtype), w2_ref[...],
                   preferred_element_type=jnp.float32) + b2_ref[...])
    o_ref[...] = out.astype(o_ref.dtype)


# ----------------------------------------------------------------------------
# One-time weight packing (do this once, outside the training/inference loop)
# ----------------------------------------------------------------------------
def pack_qnet_params(params, num_actions, dueling=False,
                     compute_dtype=jnp.bfloat16):
    """Returns (W1, b1, W2, b2) laid out for the kernel.

    * W1: (F, H) or fused (F, 2H) = [Wa1 | Wv1]; cast to compute_dtype.
    * W2: (H or 2H, 128) zero-padded lane slab; cast to compute_dtype.
      For dueling, the mean-subtraction and value add are folded in
      (linearity of the mean), so no epilogue is needed in the kernel.
    * Biases stay f32 (added to the f32 MXU accumulator).
    """
    assert num_actions <= OUT_LANES
    if not dueling:
        w1, b1, w2, b2 = params
        h = w1.shape[1]
        w2p = jnp.zeros((h, OUT_LANES), jnp.float32).at[:, :num_actions].set(w2)
        b2p = jnp.zeros((1, OUT_LANES), jnp.float32).at[:, :num_actions].set(b2)
        return (w1.astype(compute_dtype), b1.astype(jnp.float32),
                w2p.astype(compute_dtype), b2p.astype(jnp.float32))

    wa1, ba1, wa2, ba2, wv1, bv1, wv2, bv2 = params
    h = wa1.shape[1]
    w1f = jnp.concatenate([wa1, wv1], axis=1)          # (F, 2H)
    b1f = jnp.concatenate([ba1, bv1], axis=1)          # (1, 2H)

    # Fold Q = val + (adv - mean(adv)) into the second layer:
    wa2c = wa2 - jnp.mean(wa2, axis=1, keepdims=True)              # (H, A)
    ba2c = ba2 - jnp.mean(ba2, axis=1, keepdims=True) + bv2        # (1, A)
    w2f = jnp.zeros((2 * h, OUT_LANES), jnp.float32)
    w2f = w2f.at[:h, :num_actions].set(wa2c)                       # adv head
    w2f = w2f.at[h:, :num_actions].set(
        jnp.broadcast_to(wv2, (h, num_actions)))                   # val head
    b2f = jnp.zeros((1, OUT_LANES), jnp.float32).at[:, :num_actions].set(ba2c)
    return (w1f.astype(compute_dtype), b1f.astype(jnp.float32),
            w2f.astype(compute_dtype), b2f.astype(jnp.float32))


# ----------------------------------------------------------------------------
# Wrapper
# ----------------------------------------------------------------------------
def _choose_batch_tile(batch, align, max_tile, min_grid=2):
    """Sublane-aligned batch tile; prefer >= min_grid grid steps (v7x 2 TCs)."""
    if batch > align:
        target = -(-batch // min_grid)   # cdiv -> at least min_grid tiles
    else:
        target = batch
    tb = min(max(target, align), max_tile)
    return ((tb + align - 1) // align) * align


def qnet_forward(x, packed_params, num_actions, max_batch_tile=1024,
                 min_grid=2):
    """x: (B, input_feature) f32/bf16.  Returns (B, num_actions) Q values."""
    w1, b1, w2, b2 = packed_params
    compute_dtype = w1.dtype
    B, F = x.shape
    assert F == w1.shape[0]

    align = 16 if compute_dtype == jnp.bfloat16 else 8
    tb = _choose_batch_tile(B, align, max_batch_tile, min_grid)
    b_pad = pl.cdiv(B, tb) * tb

    x = x.astype(compute_dtype)            # bf16 halves the x DMA bytes
    if b_pad != B:
        x = jnp.pad(x, ((0, b_pad - B), (0, 0)))
    grid = (b_pad // tb,)
    out_dtype = compute_dtype               # bf16 out halves write-back

    # Explicit scoped-VMEM budget: double-buffered x/out tiles + weights
    # (assume double-buffered too) + headroom.  Keeps v5e (16 MiB default) safe
    # if tiles / input_feature grow.
    need = 2 * tb * F * jnp.dtype(compute_dtype).itemsize
    need += 2 * tb * OUT_LANES * jnp.dtype(out_dtype).itemsize
    need += 2 * sum(int(a.size) * a.dtype.itemsize for a in (w1, b1, w2, b2))
    vmem_limit = int(min(max(2 * need + (2 << 20), 8 << 20), 100 << 20))

    def resident(a):
        # Full-array block, constant block index -> stays resident in VMEM.
        return pl.BlockSpec(a.shape, lambda i: (0,) * a.ndim)

    out_padded = pl.pallas_call(
        _mlp_kernel,
        out_shape=jax.ShapeDtypeStruct((b_pad, OUT_LANES), out_dtype),
        grid=grid,
        in_specs=[
            pl.BlockSpec((tb, F), lambda i: (i, 0)),
            resident(w1), resident(b1), resident(w2), resident(b2),
        ],
        out_specs=pl.BlockSpec((tb, OUT_LANES), lambda i: (i, 0)),
        compiler_params=pltpu.CompilerParams(
            dimension_semantics=("parallel",),
            vmem_limit_bytes=vmem_limit),
    )(x, w1, b1, w2, b2)

    return out_padded[:B, :num_actions]


# ----------------------------------------------------------------------------
# Parameter init (mimics PyTorch nn.Linear default uniform init)
# ----------------------------------------------------------------------------
def _init_linear(key, fan_in, fan_out):
    kw, kb = jax.random.split(key)
    bound = 1.0 / jnp.sqrt(jnp.float32(fan_in))
    # Stored as (in, out) = PyTorch weight.T, so the kernel does x @ W.
    w = jax.random.uniform(kw, (fan_in, fan_out), jnp.float32, -bound, bound)
    b = jax.random.uniform(kb, (1, fan_out), jnp.float32, -bound, bound)
    return w, b


def make_params(key, input_feature, num_actions, dueling=False):
    if not dueling:
        k1, k2 = jax.random.split(key)
        w1, b1 = _init_linear(k1, input_feature, HIDDEN)
        w2, b2 = _init_linear(k2, HIDDEN, num_actions)
        return (w1, b1, w2, b2)
    ka1, ka2, kv1, kv2 = jax.random.split(key, 4)
    wa1, ba1 = _init_linear(ka1, input_feature, HIDDEN)
    wa2, ba2 = _init_linear(ka2, HIDDEN, num_actions)
    wv1, bv1 = _init_linear(kv1, input_feature, HIDDEN)
    wv2, bv2 = _init_linear(kv2, HIDDEN, 1)
    return (wa1, ba1, wa2, ba2, wv1, bv1, wv2, bv2)


# ----------------------------------------------------------------------------
# Pure-JAX reference (unfused, matches the PyTorch module exactly)
# ----------------------------------------------------------------------------
def ref_forward(x, params, dueling=False):
    if not dueling:
        w1, b1, w2, b2 = params
        h = jnp.maximum(x @ w1 + b1, 0.0)
        return h @ w2 + b2
    wa1, ba1, wa2, ba2, wv1, bv1, wv2, bv2 = params
    adv = jnp.maximum(x @ wa1 + ba1, 0.0) @ wa2 + ba2
    val = jnp.maximum(x @ wv1 + bv1, 0.0) @ wv2 + bv2
    return val + (adv - jnp.mean(adv, axis=1, keepdims=True))


if __name__ == "__main__":
    key = jax.random.PRNGKey(0)
    kx, kx2, kx3, kp_plain, kp_duel = jax.random.split(key, 5)

    batch = 8
    input_feature = 32
    num_actions = 4

    x = jax.random.normal(kx, (batch, input_feature), jnp.float32)

    # --- Non-dueling Qnet, bf16 compute path (v6e/v7x default) -------------
    params_plain = make_params(kp_plain, input_feature, num_actions, dueling=False)
    packed_plain_bf16 = pack_qnet_params(params_plain, num_actions,
                                         dueling=False,
                                         compute_dtype=jnp.bfloat16)
    q_plain = qnet_forward(x, packed_plain_bf16, num_actions)
    jax.block_until_ready(q_plain)
    ref_plain = ref_forward(x, params_plain, dueling=False)
    assert q_plain.shape == (batch, num_actions)
    assert jnp.allclose(q_plain.astype(jnp.float32), ref_plain,
                        atol=5e-2, rtol=5e-2)

    # --- Dueling Qnet, bf16 compute path (folded epilogue) -----------------
    params_duel = make_params(kp_duel, input_feature, num_actions, dueling=True)
    packed_duel_bf16 = pack_qnet_params(params_duel, num_actions,
                                        dueling=True,
                                        compute_dtype=jnp.bfloat16)
    q_duel = qnet_forward(x, packed_duel_bf16, num_actions)
    jax.block_until_ready(q_duel)
    ref_duel = ref_forward(x, params_duel, dueling=True)
    assert q_duel.shape == (batch, num_actions)
    assert jnp.allclose(q_duel.astype(jnp.float32), ref_duel,
                        atol=5e-2, rtol=5e-2)

    # --- Dueling Qnet, f32 path, non-aligned batch (tight check of folding) -
    packed_duel_f32 = pack_qnet_params(params_duel, num_actions,
                                       dueling=True,
                                       compute_dtype=jnp.float32)
    x_odd = jax.random.normal(kx2, (10, input_feature), jnp.float32)
    q_odd = qnet_forward(x_odd, packed_duel_f32, num_actions)
    jax.block_until_ready(q_odd)
    ref_odd = ref_forward(x_odd, params_duel, dueling=True)
    assert q_odd.shape == (10, num_actions)
    assert jnp.allclose(q_odd, ref_odd, atol=1e-4, rtol=1e-4)

    # --- Larger non-aligned batch: multi-step parallel grid + row padding ---
    x_big = jax.random.normal(kx3, (40, input_feature), jnp.float32)
    q_big = qnet_forward(x_big, packed_duel_bf16, num_actions)
    jax.block_until_ready(q_big)
    ref_big = ref_forward(x_big, params_duel, dueling=True)
    assert q_big.shape == (40, num_actions)
    assert jnp.allclose(q_big.astype(jnp.float32), ref_big,
                        atol=5e-2, rtol=5e-2)

    # TODO(synk): input_type='image' branch has no layers (forward returns None),
    # so there is nothing to lower for it.

    print("KERNEL_OK")
</pallas_src>

<mosaic_0001>
module attributes {stable_mosaic.version = 11 : i64} {
  func.func @_mlp_kernel(%arg0: i32, %arg1: memref<16x32xbf16, #tpu.memory_space<vmem>>, %arg2: memref<32x256xbf16, #tpu.memory_space<vmem>>, %arg3: memref<1x256xf32, #tpu.memory_space<vmem>>, %arg4: memref<256x128xbf16, #tpu.memory_space<vmem>>, %arg5: memref<1x128xf32, #tpu.memory_space<vmem>>, %arg6: memref<16x128xbf16, #tpu.memory_space<vmem>>) attributes {dimension_semantics = [#tpu.dimension_semantics<parallel>], iteration_bounds = array<i64: 1>, scalar_prefetch = 0 : i64, scratch_operands = 0 : i64, tpu.core_type = #tpu.core_type<tc>, window_params = [{transform_indices = @transform_0, window_bounds = array<i64: 16, 32>}, {pipeline_mode = #tpu.pipeline_mode<synchronous>, transform_indices = @transform_1, window_bounds = array<i64: 32, 256>}, {pipeline_mode = #tpu.pipeline_mode<synchronous>, transform_indices = @transform_2, window_bounds = array<i64: 1, 256>}, {pipeline_mode = #tpu.pipeline_mode<synchronous>, transform_indices = @transform_3, window_bounds = array<i64: 256, 128>}, {pipeline_mode = #tpu.pipeline_mode<synchronous>, transform_indices = @transform_4, window_bounds = array<i64: 1, 128>}, {transform_indices = @transform_5, window_bounds = array<i64: 16, 128>}]} {
    %c0 = arith.constant 0 : index
    %c0_0 = arith.constant 0 : index
    %0 = vector.load %arg1[%c0, %c0_0] : memref<16x32xbf16, #tpu.memory_space<vmem>>, vector<16x32xbf16>
    %c0_1 = arith.constant 0 : index
    %c0_2 = arith.constant 0 : index
    %1 = vector.load %arg2[%c0_1, %c0_2] : memref<32x256xbf16, #tpu.memory_space<vmem>>, vector<32x256xbf16>
    %cst = arith.constant dense<0.000000e+00> : vector<16x256xf32>
    %2 = tpu.matmul %0, %1, %cst {dimension_numbers = #tpu.dot_dimension_numbers<[1], [0], [0], [1], [0, 0, 1, 1], [], []>} : vector<16x32xbf16>, vector<32x256xbf16>, vector<16x256xf32> -> vector<16x256xf32>
    %c0_3 = arith.constant 0 : index
    %c0_4 = arith.constant 0 : index
    %3 = vector.load %arg3[%c0_3, %c0_4] : memref<1x256xf32, #tpu.memory_space<vmem>>, vector<1x256xf32>
    %4 = vector.broadcast %3 : vector<1x256xf32> to vector<16x256xf32>
    %5 = arith.addf %2, %4 : vector<16x256xf32>
    %cst_5 = arith.constant 0.000000e+00 : f32
    %6 = vector.broadcast %cst_5 : f32 to vector<16x256xf32>
    %7 = arith.maximumf %5, %6 : vector<16x256xf32>
    %8 = arith.truncf %7 : vector<16x256xf32> to vector<16x256xbf16>
    %c0_6 = arith.constant 0 : index
    %c0_7 = arith.constant 0 : index
    %9 = vector.load %arg4[%c0_6, %c0_7] : memref<256x128xbf16, #tpu.memory_space<vmem>>, vector<256x128xbf16>
    %cst_8 = arith.constant dense<0.000000e+00> : vector<16x128xf32>
    %10 = tpu.matmul %8, %9, %cst_8 {dimension_numbers = #tpu.dot_dimension_numbers<[1], [0], [0], [1], [0, 0, 1, 1], [], []>} : vector<16x256xbf16>, vector<256x128xbf16>, vector<16x128xf32> -> vector<16x128xf32>
    %c0_9 = arith.constant 0 : index
    %c0_10 = arith.constant 0 : index
    %11 = vector.load %arg5[%c0_9, %c0_10] : memref<1x128xf32, #tpu.memory_space<vmem>>, vector<1x128xf32>
    %12 = vector.broadcast %11 : vector<1x128xf32> to vector<16x128xf32>
    %13 = arith.addf %10, %12 : vector<16x128xf32>
    %14 = arith.truncf %13 : vector<16x128xf32> to vector<16x128xbf16>
    %c0_11 = arith.constant 0 : index
    %c0_12 = arith.constant 0 : index
    %15 = vector.load %arg6[%c0_11, %c0_12] : memref<16x128xbf16, #tpu.memory_space<vmem>>, vector<16x128xbf16>
    tpu.vector_store %arg6[%c0_11, %c0_12], %14 {strides = array<i32>} : memref<16x128xbf16, #tpu.memory_space<vmem>>, vector<16x128xbf16>,
    return
  }
  func.func @transform_0(%arg0: i32) -> (i32, i32) {
    %c0_i32 = arith.constant 0 : i32
    %c0_i32_0 = arith.constant 0 : i32
    return %arg0, %c0_i32 : i32, i32
  }
  func.func @transform_1(%arg0: i32) -> (i32, i32) {
    %c0_i32 = arith.constant 0 : i32
    %c0_i32_0 = arith.constant 0 : i32
    %c0_i32_1 = arith.constant 0 : i32
    return %c0_i32, %c0_i32_0 : i32, i32
  }
  func.func @transform_2(%arg0: i32) -> (i32, i32) {
    %c0_i32 = arith.constant 0 : i32
    %c0_i32_0 = arith.constant 0 : i32
    %c0_i32_1 = arith.constant 0 : i32
    return %c0_i32, %c0_i32_0 : i32, i32
  }
  func.func @transform_3(%arg0: i32) -> (i32, i32) {
    %c0_i32 = arith.constant 0 : i32
    %c0_i32_0 = arith.constant 0 : i32
    %c0_i32_1 = arith.constant 0 : i32
    return %c0_i32, %c0_i32_0 : i32, i32
  }
  func.func @transform_4(%arg0: i32) -> (i32, i32) {
    %c0_i32 = arith.constant 0 : i32
    %c0_i32_0 = arith.constant 0 : i32
    %c0_i32_1 = arith.constant 0 : i32
    return %c0_i32, %c0_i32_0 : i32, i32
  }
  func.func @transform_5(%arg0: i32) -> (i32, i32) {
    %c0_i32 = arith.constant 0 : i32
    %c0_i32_0 = arith.constant 0 : i32
    return %arg0, %c0_i32 : i32, i32
  }
}

</mosaic_0001>

<llo_original>
// kernel: tpu_custom_call.1
$region0: #{tpu_custom_call.1}
  #allocation0 [shape = 'u32[]', space=smem, size = 0x4, offset = 0x4, fixed_abs, tag = 'smem constant byte address 0x4 - core index']
  #allocation1 [shape = 'u32[144,128]{1,0:T(1,128)}', space=vmem, size = 0x12000, scoped, tag = 'internal scratch']
  %s0 = inlined_call_operand.hbm [shape: bf16[16,32], index: 0, kind: input, shape index: {}]
  %s1 = inlined_call_operand.hbm [shape: bf16[32,256], index: 1, kind: input, shape index: {}]
  %s2 = inlined_call_operand.vmem [shape: f32[1,256], index: 2, kind: input, shape index: {}]
  %s3 = inlined_call_operand.hbm [shape: bf16[256,128], index: 3, kind: input, shape index: {}]
  %s4 = inlined_call_operand.vmem [shape: f32[1,128], index: 4, kind: input, shape index: {}]
  %s5 = inlined_call_operand.hbm [shape: bf16[16,128], index: 5, kind: output, shape index: {}]
  %s6 = sld [smem:[#allocation0]]
  $region42: #{tpu_custom_call.1} parent=0
    _
  %s8 = ssub.s32 1, %s6
  %s9 = scalar_select 0, %s8, %s6
  $region1: #{tpu_custom_call.1} parent=0
    #allocation2 [shape = 'u8[4096]{0}', space=vmem, size = 0x1000, scoped, tag = 'input window, operand 0, single buffered']
    #allocation3 [shape = 's32[1]{0}', space=sflag, size = 0x4, scoped, tag = 'scoped memory for tpu_custom_call.1']
    #allocation4 [shape = 's32[1]{0}', space=sflag, size = 0x4, scoped, tag = 'scoped memory for tpu_custom_call.1']
    #allocation5 [shape = 'u8[16384]{0}', space=vmem, size = 0x4000, scoped, tag = 'input window, operand 1, single buffered']
    #allocation6 [shape = 's32[1]{0}', space=sflag, size = 0x4, scoped, tag = 'scoped memory for tpu_custom_call.1']
    #allocation7 [shape = 'u8[65536]{0}', space=vmem, size = 0x10000, scoped, tag = 'input window, operand 3, single buffered']
    #allocation8 [shape = 'u8[4096]{0}', space=vmem, size = 0x1000, scoped, tag = 'output window, operand 0, single buffered']
    %10 = vsyncpa [#allocation3], 0
    %11 = vsyncpa [#allocation6], 0
    %12 = vsyncpa [#allocation4], 0
    // Predicated region
    $region2: #{tpu_custom_call.1} parent=1 // pred_check
      _
    $region3: #{tpu_custom_call.1} parent=1 // pred_check_branch
      %14 = sbr.rel (0) target = $region5
    $region4: #{tpu_custom_call.1} parent=1 // pred_region
      %s16 = ssub.s32 128, 128
      %17 = vsyncadd [#allocation3], %s16
      %s18 = sshll.u32 [#allocation2], 4
      %s19 = int_to_ptr.vmem [resolvable:$true] %s18
      %24 = dma.hbm_to_vmem [thread:$0]  %s0, 128, %s19, [#allocation3], 64, 64, 4
    $region5: #{tpu_custom_call.1} parent=1 // pred_fallthru
      _
    // Predicated region
    $region6: #{tpu_custom_call.1} parent=1 // pred_check
      _
    $region7: #{tpu_custom_call.1} parent=1 // pred_check_branch
      %26 = sbr.rel (0) target = $region9
    $region8: #{tpu_custom_call.1} parent=1 // pred_region
      %s28 = ssub.s32 512, 512
      %29 = vsyncadd [#allocation6], %s28
      %s30 = sshll.u32 [#allocation5], 4
      %s31 = int_to_ptr.vmem [resolvable:$true] %s30
      %36 = dma.hbm_to_vmem [thread:$0]  %s1, 512, %s31, [#allocation6], 128, 128, 8
    $region9: #{tpu_custom_call.1} parent=1 // pred_fallthru
      _
    // Predicated region
    $region10: #{tpu_custom_call.1} parent=1 // pred_check
      _
    $region11: #{tpu_custom_call.1} parent=1 // pred_check_branch
      %38 = sbr.rel (0) target = $region13
    $region12: #{tpu_custom_call.1} parent=1 // pred_region
      _
    $region13: #{tpu_custom_call.1} parent=1 // pred_fallthru
      _
    // Predicated region
    $region14: #{tpu_custom_call.1} parent=1 // pred_check
      _
    $region15: #{tpu_custom_call.1} parent=1 // pred_check_branch
      %40 = sbr.rel (0) target = $region17
    $region16: #{tpu_custom_call.1} parent=1 // pred_region
      %s42 = ssub.s32 2048, 2048
      %43 = vsyncadd [#allocation6], %s42
      %s44 = sshll.u32 [#allocation7], 4
      %s45 = int_to_ptr.vmem [resolvable:$true] %s44
      %50 = dma.hbm_to_vmem [thread:$0]  %s3, 2048, %s45, [#allocation6], 64, 64, 4
    $region17: #{tpu_custom_call.1} parent=1 // pred_fallthru
      _
    // Predicated region
    $region18: #{tpu_custom_call.1} parent=1 // pred_check
      _
    $region19: #{tpu_custom_call.1} parent=1 // pred_check_branch
      %52 = sbr.rel (0) target = $region21
    $region20: #{tpu_custom_call.1} parent=1 // pred_region
      _
    $region21: #{tpu_custom_call.1} parent=1 // pred_fallthru
      _
    // Predicated region
    $region22: #{tpu_custom_call.1} parent=1 // pred_check
      _
    $region23: #{tpu_custom_call.1} parent=1 // pred_check_branch
      %54 = sbr.rel (0) target = $region25
    $region24: #{tpu_custom_call.1} parent=1 // pred_region
      %55 = dma.done [#allocation3], 128
    $region25: #{tpu_custom_call.1} parent=1 // pred_fallthru
      _
    // Predicated region
    $region26: #{tpu_custom_call.1} parent=1 // pred_check
      _
    $region27: #{tpu_custom_call.1} parent=1 // pred_check_branch
      %57 = sbr.rel (0) target = $region29
    $region28: #{tpu_custom_call.1} parent=1 // pred_region
      %58 = dma.done [#allocation6], 512
    $region29: #{tpu_custom_call.1} parent=1 // pred_fallthru
      _
    // Predicated region
    $region30: #{tpu_custom_call.1} parent=1 // pred_check
      _
    $region31: #{tpu_custom_call.1} parent=1 // pred_check_branch
      %60 = sbr.rel (0) target = $region33
    $region32: #{tpu_custom_call.1} parent=1 // pred_region
      %61 = dma.done [#allocation6], 2048
    $region33: #{tpu_custom_call.1} parent=1 // pred_fallthru
      _
    %v63 = vld [vmem:[#allocation2] sm:$0xf]
    %v64 = vld [vmem:[#allocation2 + $0x4] sm:$0xf]
    %v65 = vld [vmem:[#allocation5] sm:$0xff]
    %v66 = vld [vmem:[#allocation5 + $0x8] sm:$0xff]
    %v67 = vld [vmem:[#allocation5 + $0x10] sm:$0xff]
    %v68 = vld [vmem:[#allocation5 + $0x18] sm:$0xff]
    %v69 = vld [vmem:[%s2] sm:$0x3]
    %v71 = vlaneseq
    %v72 = vshrl.u32 %v71, 7
    %v73 = vsub.s32 0, %v72
    %v74 = vrot.slane %v69, %v73
    %v75 = vlaneseq
    %v76 = vshrl.u32 %v75, 7
    %v77 = vsub.s32 1, %v76
    %v78 = vrot.slane %v69, %v77
    %v83 = vunpack.c.l.b16 %v63
    %v84 = vunpack.c.l.b16 %v64
    %v85 = vpack.c.b16 %v84, %v83
    %v90 = vunpack.c.l.b16 %v65
    %v91 = vunpack.c.h.b16 %v65
    %v92 = vunpack.c.l.b16 %v66
    %v93 = vunpack.c.h.b16 %v66
    %v94 = vunpack.c.l.b16 %v67
    %v95 = vunpack.c.h.b16 %v67
    %v96 = vunpack.c.l.b16 %v68
    %v97 = vunpack.c.h.b16 %v68
    %v98 = vpack.c.b16 %v92, %v90
    %v99 = vpack.c.b16 %v93, %v91
    %v100 = vpack.c.b16 %v96, %v94
    %v101 = vpack.c.b16 %v97, %v95
    %vm106 = vcmask 261120
    %v108 = vsel %vm106, %v85, 0
    %110 = vmatprep.subr.bf16.mxu0 %v99
    %111 = vmatpush1.bf16.msra.mxu0 %v98
    %112 = vmatprep.subr.bf16.mxu0 %v101
    %113 = vmatpush1.bf16.msra.mxu0 %v100
    %114 = vmatprep.subr.bf16.mxu0 0
    %115 = vmatpush1.bf16.msra.mxu0 0
    %116 = vmatprep.subr.bf16.mxu0 0
    %117 = vmatpush1.bf16.msra.mxu0 0
    %118 = vmatprep.subr.bf16.mxu0 0
    %119 = vmatpush1.bf16.msra.mxu0 0
    %120 = vmatprep.subr.bf16.mxu0 0
    %121 = vmatpush1.bf16.msra.mxu0 0
    %122 = vmatprep.subr.bf16.mxu0 0
    %123 = vmatpush1.bf16.msra.mxu0 0
    %124 = vmatprep.subr.bf16.mxu0 0
    %125 = vmatpush1.bf16.msra.mxu0 0
    %126 = vmatprep.subr.bf16.mxu0 0
    %127 = vmatpush1.bf16.msra.mxu0 0
    %128 = vmatprep.subr.bf16.mxu0 0
    %129 = vmatpush1.bf16.msra.mxu0 0
    %130 = vmatprep.subr.bf16.mxu0 0
    %131 = vmatpush1.bf16.msra.mxu0 0
    %132 = vmatprep.subr.bf16.mxu0 0
    %133 = vmatpush1.bf16.msra.mxu0 0
    %134 = vmatprep.subr.bf16.mxu0 0
    %135 = vmatpush1.bf16.msra.mxu0 0
    %136 = vmatprep.subr.bf16.mxu0 0
    %137 = vmatpush1.bf16.msra.mxu0 0
    %138 = vmatprep.subr.bf16.mxu0 0
    %139 = vmatpush1.bf16.msra.mxu0 0
    %140 = vmatprep.subr.bf16.mxu0 0
    %141 = vmatpush1.bf16.msra.mxu0 0
    %142 = vmatprep.mubr.bf16.mxu0 0
    %143 = vmatmul.mubr.bf16.gmra.mrb[0].mxu0 %v108
    %v144 = vpop.f32.mrb[0].mxu0
    %v145 = vadd.f32 %v74, %v144
    %v146 = vpop.f32.mrb[0].mxu0
    %v147 = vadd.f32 %v78, %v146
    %v148 = vpop.f32.mrb[0].mxu0
    %v149 = vadd.f32 %v74, %v148
    %v150 = vpop.f32.mrb[0].mxu0
    %v151 = vadd.f32 %v78, %v150
    %152 = vdwg.mxu0
    %v153 = vmax.f32 %v145, 0.0
    %v154 = vmax.f32 %v147, 0.0
    %v155 = vmax.f32 %v149, 0.0
    %v156 = vmax.f32 %v151, 0.0
    %v157 = vpack.c.bf16 %v155, %v153
    %v158 = vpack.c.bf16 %v156, %v154
    %v159 = vld [vmem:[#allocation7] sm:$0xf]
    %v160 = vld [vmem:[#allocation7 + $0x4] sm:$0xf]
    %v161 = vld [vmem:[#allocation7 + $0x8] sm:$0xf]
    %v162 = vld [vmem:[#allocation7 + $0xc] sm:$0xf]
    %v163 = vld [vmem:[#allocation7 + $0x10] sm:$0xf]
    %v164 = vld [vmem:[#allocation7 + $0x14] sm:$0xf]
    %v165 = vld [vmem:[#allocation7 + $0x18] sm:$0xf]
    %v166 = vld [vmem:[#allocation7 + $0x1c] sm:$0xf]
    %v167 = vld [vmem:[#allocation7 + $0x20] sm:$0xf]
    %v168 = vld [vmem:[#allocation7 + $0x24] sm:$0xf]
    %v169 = vld [vmem:[#allocation7 + $0x28] sm:$0xf]
    %v170 = vld [vmem:[#allocation7 + $0x2c] sm:$0xf]
    %v171 = vld [vmem:[#allocation7 + $0x30] sm:$0xf]
    %v172 = vld [vmem:[#allocation7 + $0x34] sm:$0xf]
    %v173 = vld [vmem:[#allocation7 + $0x38] sm:$0xf]
    %v174 = vld [vmem:[#allocation7 + $0x3c] sm:$0xf]
    %v175 = vld [vmem:[#allocation7 + $0x40] sm:$0xf]
    %v176 = vld [vmem:[#allocation7 + $0x44] sm:$0xf]
    %v177 = vld [vmem:[#allocation7 + $0x48] sm:$0xf]
    %v178 = vld [vmem:[#allocation7 + $0x4c] sm:$0xf]
    %v179 = vld [vmem:[#allocation7 + $0x50] sm:$0xf]
    %v180 = vld [vmem:[#allocation7 + $0x54] sm:$0xf]
    %v181 = vld [vmem:[#allocation7 + $0x58] sm:$0xf]
    %v182 = vld [vmem:[#allocation7 + $0x5c] sm:$0xf]
    %v183 = vld [vmem:[#allocation7 + $0x60] sm:$0xf]
    %v184 = vld [vmem:[#allocation7 + $0x64] sm:$0xf]
    %v185 = vld [vmem:[#allocation7 + $0x68] sm:$0xf]
    %v186 = vld [vmem:[#allocation7 + $0x6c] sm:$0xf]
    %v187 = vld [vmem:[#allocation7 + $0x70] sm:$0xf]
    %v188 = vld [vmem:[#allocation7 + $0x74] sm:$0xf]
    %v189 = vld [vmem:[#allocation7 + $0x78] sm:$0xf]
    %v190 = vld [vmem:[#allocation7 + $0x7c] sm:$0xf]
    %v191 = vld [vmem:[%s4] sm:$0x1]
    %v193 = vlaneseq
    %v194 = vshrl.u32 %v193, 7
    %v195 = vsub.s32 0, %v194
    %v196 = vrot.slane %v191, %v195
    %v230 = vunpack.c.l.b16 %v159
    %v231 = vunpack.c.l.b16 %v160
    %v232 = vunpack.c.l.b16 %v161
    %v233 = vunpack.c.l.b16 %v162
    %v234 = vunpack.c.l.b16 %v163
    %v235 = vunpack.c.l.b16 %v164
    %v236 = vunpack.c.l.b16 %v165
    %v237 = vunpack.c.l.b16 %v166
    %v238 = vunpack.c.l.b16 %v167
    %v239 = vunpack.c.l.b16 %v168
    %v240 = vunpack.c.l.b16 %v169
    %v241 = vunpack.c.l.b16 %v170
    %v242 = vunpack.c.l.b16 %v171
    %v243 = vunpack.c.l.b16 %v172
    %v244 = vunpack.c.l.b16 %v173
    %v245 = vunpack.c.l.b16 %v174
    %v246 = vunpack.c.l.b16 %v175
    %v247 = vunpack.c.l.b16 %v176
    %v248 = vunpack.c.l.b16 %v177
    %v249 = vunpack.c.l.b16 %v178
    %v250 = vunpack.c.l.b16 %v179
    %v251 = vunpack.c.l.b16 %v180
    %v252 = vunpack.c.l.b16 %v181
    %v253 = vunpack.c.l.b16 %v182
    %v254 = vunpack.c.l.b16 %v183
    %v255 = vunpack.c.l.b16 %v184
    %v256 = vunpack.c.l.b16 %v185
    %v257 = vunpack.c.l.b16 %v186
    %v258 = vunpack.c.l.b16 %v187
    %v259 = vunpack.c.l.b16 %v188
    %v260 = vunpack.c.l.b16 %v189
    %v261 = vunpack.c.l.b16 %v190
    %v262 = vpack.c.b16 %v231, %v230
    %v263 = vpack.c.b16 %v233, %v232
    %v264 = vpack.c.b16 %v235, %v234
    %v265 = vpack.c.b16 %v237, %v236
    %v266 = vpack.c.b16 %v239, %v238
    %v267 = vpack.c.b16 %v241, %v240
    %v268 = vpack.c.b16 %v243, %v242
    %v269 = vpack.c.b16 %v245, %v244
    %v270 = vpack.c.b16 %v247, %v246
    %v271 = vpack.c.b16 %v249, %v248
    %v272 = vpack.c.b16 %v251, %v250
    %v273 = vpack.c.b16 %v253, %v252
    %v274 = vpack.c.b16 %v255, %v254
    %v275 = vpack.c.b16 %v257, %v256
    %v276 = vpack.c.b16 %v259, %v258
    %v277 = vpack.c.b16 %v261, %v260
    %294 = vmatprep.subr.bf16.mxu0 0
    %295 = vmatpush1.bf16.msra.mxu0 %v262
    %296 = vmatprep.subr.bf16.mxu0 0
    %297 = vmatpush1.bf16.msra.mxu0 %v263
    %298 = vmatprep.subr.bf16.mxu0 0
    %299 = vmatpush1.bf16.msra.mxu0 %v264
    %300 = vmatprep.subr.bf16.mxu0 0
    %301 = vmatpush1.bf16.msra.mxu0 %v265
    %302 = vmatprep.subr.bf16.mxu0 0
    %303 = vmatpush1.bf16.msra.mxu0 %v266
    %304 = vmatprep.subr.bf16.mxu0 0
    %305 = vmatpush1.bf16.msra.mxu0 %v267
    %306 = vmatprep.subr.bf16.mxu0 0
    %307 = vmatpush1.bf16.msra.mxu0 %v268
    %308 = vmatprep.subr.bf16.mxu0 0
    %309 = vmatpush1.bf16.msra.mxu0 %v269
    %310 = vmatprep.subr.bf16.mxu0 0
    %311 = vmatpush1.bf16.msra.mxu0 %v270
    %312 = vmatprep.subr.bf16.mxu0 0
    %313 = vmatpush1.bf16.msra.mxu0 %v271
    %314 = vmatprep.subr.bf16.mxu0 0
    %315 = vmatpush1.bf16.msra.mxu0 %v272
    %316 = vmatprep.subr.bf16.mxu0 0
    %317 = vmatpush1.bf16.msra.mxu0 %v273
    %318 = vmatprep.subr.bf16.mxu0 0
    %319 = vmatpush1.bf16.msra.mxu0 %v274
    %320 = vmatprep.subr.bf16.mxu0 0
    %321 = vmatpush1.bf16.msra.mxu0 %v275
    %322 = vmatprep.subr.bf16.mxu0 0
    %323 = vmatpush1.bf16.msra.mxu0 %v276
    %324 = vmatprep.subr.bf16.mxu0 0
    %325 = vmatpush1.bf16.msra.mxu0 %v277
    %326 = vmatprep.mubr.bf16.mxu0 %v158
    %327 = vmatmul.mubr.bf16.gmra.mrb[0].mxu0 %v157
    %v328 = vpop.f32.mrb[0].mxu0
    %v329 = vadd.f32 %v196, %v328
    %v330 = vpop.f32.mrb[0].mxu0
    %v331 = vpop.f32.mrb[0].mxu0
    %v332 = vadd.f32 %v196, %v331
    %v333 = vpop.f32.mrb[0].mxu0
    %334 = vdwg.mxu0
    %v335 = vpack.c.bf16 %v332, %v329
    %v337 = vunpack.c.l.b16 %v335
    %v338 = vunpack.c.h.b16 %v335
    %v339 = vpack.c.b16 %v337, %v337
    %v340 = vpack.c.b16 %v338, %v338
    %343 = vst [vmem:[#allocation8] sm:$0xf] %v339
    %344 = vst [vmem:[#allocation8 + $0x4] sm:$0xf] %v340
    // Predicated region
    $region34: #{tpu_custom_call.1} parent=1 // pred_check
      _
    $region35: #{tpu_custom_call.1} parent=1 // pred_check_branch
      %346 = sbr.rel (0) target = $region37
    $region36: #{tpu_custom_call.1} parent=1 // pred_region
      %s348 = ssub.s32 128, 128
      %349 = vsyncadd [#allocation4], %s348
      %s350 = sshll.u32 [#allocation8], 4
      %s351 = int_to_ptr.vmem [resolvable:$true] %s350
      %356 = dma.vmem_to_hbm [thread:$0]  %s351, 128, %s5, [#allocation4], 64, 64, 4
    $region37: #{tpu_custom_call.1} parent=1 // pred_fallthru
      _
    // Predicated region
    $region38: #{tpu_custom_call.1} parent=1 // pred_check
      _
    $region39: #{tpu_custom_call.1} parent=1 // pred_check_branch
      %358 = sbr.rel (0) target = $region41
    $region40: #{tpu_custom_call.1} parent=1 // pred_region
      %359 = dma.done [#allocation4], 128
    $region41: #{tpu_custom_call.1} parent=1 // pred_fallthru
      _
    %360 = vsyncpa [#allocation3], 1
    %361 = vsyncpa [#allocation6], 1
    %362 = vsyncpa [#allocation4], 1

</llo_original>
